<compile_context>
chip_gen: v7x
topology: tpu7x:2x2x1
jax: 0.10.0
libtpu: 0.0.40
codegen_flags: <defaults>
</compile_context>

<pallas_src>
import functools

import jax
import jax.numpy as jnp
from jax.experimental import pallas as pl
from jax.experimental.pallas import tpu as pltpu


def _round_up(x, m):
    return ((x + m - 1) // m) * m


# ---------------------------------------------------------------------------
# Fused kernel: one grid step per batch element.
# ---------------------------------------------------------------------------
def _up_double_conv_kernel(x_ref, wup_ref, bup_ref, w1_ref, b1_ref,
                           w2_ref, b2_ref, o_ref, buf_ref, *,
                           T, Lk_eff, write_off):
    """
    x_ref   : (1, Lk_eff, KUP)  phase-stacked upsample input rows (channels last)
    wup_ref : (KUP, C)          stacked ConvTranspose1d weight
    bup_ref : (1, C)            ConvTranspose1d bias (f32)
    w{1,2}_ref : (3, C, C)      conv taps, BN scale already folded in
    b{1,2}_ref : (1, C)         BN shift (f32)
    o_ref   : (1, T, C)
    buf_ref : (T + 2, C)        zero-halo VMEM scratch (F.pad zeros + conv pad=1)
    """
    cdt = buf_ref.dtype

    # 1) zero the halo'ed scratch: provides both the F.pad zeros and the conv halo.
    buf_ref[...] = jnp.zeros_like(buf_ref)

    # 2) ConvTranspose1d (stride == kernel) as a single dense matmul, written
    #    directly at the pad offset.  f32 accumulation, then cast to compute dtype.
    z = jnp.dot(x_ref[0], wup_ref[...], preferred_element_type=jnp.float32)
    z = z + bup_ref[...]
    buf_ref[pl.ds(1 + write_off, Lk_eff), :] = z.astype(cdt)

    # 3) conv3 + folded-BN bias + ReLU: three dots on overlapping halo slices.
    def conv3_bn_relu(w_ref, b_ref):
        acc = jnp.dot(buf_ref[pl.ds(0, T), :], w_ref[0],
                      preferred_element_type=jnp.float32)
        acc = acc + jnp.dot(buf_ref[pl.ds(1, T), :], w_ref[1],
                            preferred_element_type=jnp.float32)
        acc = acc + jnp.dot(buf_ref[pl.ds(2, T), :], w_ref[2],
                            preferred_element_type=jnp.float32)
        return jnp.maximum(acc + b_ref[...], 0.0)

    y1 = conv3_bn_relu(w1_ref, b1_ref)            # (T, C) f32
    buf_ref[pl.ds(1, T), :] = y1.astype(cdt)      # halo rows 0 and T+1 stay zero
    y2 = conv3_bn_relu(w2_ref, b2_ref)
    o_ref[0] = y2.astype(o_ref.dtype)             # lane-dense (C = 128k) store


# ---------------------------------------------------------------------------
# Wrapper: layout plumbing, BN folding, weight stacking (all XLA glue).
# ---------------------------------------------------------------------------
def up_forward(x_ncl, params, out_shape, *, compute_dtype=jnp.float32):
    N, Cin, L = x_ncl.shape
    k = 2                                   # module hardcodes kernel_size=stride=2
    Cout = params["conv1_w"].shape[0]
    T = int(out_shape)
    Lk = L * k
    diff = T - Lk
    pad_l, pad_r = diff // 2, diff - diff // 2
    lo, hi = max(0, -pad_l), max(0, -pad_r)          # negative F.pad == crop
    Lk_eff = Lk - lo - hi
    write_off = max(pad_l, 0)
    assert Lk_eff > 0 and write_off + Lk_eff <= T

    LANE = 128
    C = _round_up(max(Cin, Cout), LANE)              # padded channel (lane) width
    KUP = _round_up(k * Cin, LANE)                   # stacked upsample contraction

    # --- activations: NCL -> NLC, repeat each row per tap and phase-split the
    #     channels so the ConvTranspose is ONE (Lk, KUP) @ (KUP, C) matmul. ---
    x_nlc = jnp.transpose(x_ncl, (0, 2, 1)).astype(jnp.float32)       # (N, L, Cin)
    x_rep = jnp.repeat(x_nlc, k, axis=1)                              # row k*l+j = x[l]
    phase = jnp.arange(Lk) % k
    x_int = jnp.concatenate(
        [x_rep * (phase == j).astype(x_rep.dtype)[None, :, None] for j in range(k)],
        axis=-1)                                                      # (N, Lk, k*Cin)
    x_int = x_int[:, lo:Lk - hi, :]                                   # crop if diff < 0
    x_int = jnp.pad(x_int, ((0, 0), (0, 0), (0, KUP - k * Cin)))
    x_int = x_int.astype(compute_dtype)

    # --- ConvTranspose weight stacked along contraction axis: [j*Cin+ci, co] ---
    wup = params["up_w"]                                              # (Cin, Cin, k)
    wup_s = jnp.transpose(wup, (2, 0, 1)).reshape(k * Cin, Cin)
    wup_p = jnp.zeros((KUP, C), jnp.float32).at[:k * Cin, :Cin].set(wup_s)
    bup_p = jnp.zeros((1, C), jnp.float32).at[0, :Cin].set(params["up_b"])

    # --- fold eval-mode BatchNorm into conv weights (scale) and bias (shift) ---
    eps = 1e-5

    def fold(w_oik, g, b, m, v, ci, co):
        s = g / jnp.sqrt(v + eps)                                     # (co,)
        wf = jnp.transpose(w_oik * s[:, None, None], (2, 1, 0))       # (3, ci, co)
        wk = jnp.zeros((3, C, C), jnp.float32).at[:, :ci, :co].set(wf)
        bk = jnp.zeros((1, C), jnp.float32).at[0, :co].set(b - m * s)
        return wk, bk

    w1k, b1k = fold(params["conv1_w"], params["bn1_g"], params["bn1_b"],
                    params["bn1_m"], params["bn1_v"], Cin, Cout)
    w2k, b2k = fold(params["conv2_w"], params["bn2_g"], params["bn2_b"],
                    params["bn2_m"], params["bn2_v"], Cout, Cout)

    wup_p = wup_p.astype(compute_dtype)       # matmul operands in compute dtype,
    w1k = w1k.astype(compute_dtype)           # accumulation stays f32 in-kernel,
    w2k = w2k.astype(compute_dtype)           # biases / BN shift / ReLU stay f32.

    kernel = functools.partial(_up_double_conv_kernel,
                               T=T, Lk_eff=Lk_eff, write_off=write_off)

    out_padded = pl.pallas_call(
        kernel,
        out_shape=jax.ShapeDtypeStruct((N, T, C), jnp.float32),
        grid=(N,),
        in_specs=[
            pl.BlockSpec((1, Lk_eff, KUP), lambda n: (n, 0, 0)),
            pl.BlockSpec((KUP, C), lambda n: (0, 0)),
            pl.BlockSpec((1, C), lambda n: (0, 0)),
            pl.BlockSpec((3, C, C), lambda n: (0, 0, 0)),
            pl.BlockSpec((1, C), lambda n: (0, 0)),
            pl.BlockSpec((3, C, C), lambda n: (0, 0, 0)),
            pl.BlockSpec((1, C), lambda n: (0, 0)),
        ],
        out_specs=pl.BlockSpec((1, T, C), lambda n: (n, 0, 0)),
        scratch_shapes=[pltpu.VMEM((T + 2, C), compute_dtype)],
        compiler_params=pltpu.CompilerParams(
            dimension_semantics=("parallel",),
            vmem_limit_bytes=48 * 1024 * 1024),
    )(x_int, wup_p, bup_p, w1k, b1k, w2k, b2k)

    # strip channel padding and return PyTorch NCL layout (glue only)
    return jnp.transpose(out_padded[:, :, :Cout], (0, 2, 1))


# ---------------------------------------------------------------------------
# Pure-JAX reference (correctness check only) — mirrors the PyTorch module.
# ---------------------------------------------------------------------------
def ref_forward(x_ncl, params, out_shape):
    N, Cin, L = x_ncl.shape
    k = 2
    Wup, bup = params["up_w"], params["up_b"]
    t = jnp.einsum("ncl,coj->nolj", x_ncl, Wup)               # (N, Cin, L, k)
    up = t.reshape(N, Cin, L * k) + bup[None, :, None]
    diff = out_shape - L * k
    pad_l, pad_r = diff // 2, diff - diff // 2
    xp = jax.lax.pad(up, jnp.array(0.0, up.dtype),
                     ((0, 0, 0), (0, 0, 0), (pad_l, pad_r, 0)))
    eps = 1e-5

    def bn(y, g, b, m, v):
        return ((y - m[None, :, None]) / jnp.sqrt(v[None, :, None] + eps)
                * g[None, :, None] + b[None, :, None])

    def conv(y, w):
        return jax.lax.conv_general_dilated(
            y, w, window_strides=(1,), padding=((1, 1),),
            dimension_numbers=("NCH", "OIH", "NCH"))

    y = jnp.maximum(bn(conv(xp, params["conv1_w"]), params["bn1_g"],
                       params["bn1_b"], params["bn1_m"], params["bn1_v"]), 0.0)
    y = jnp.maximum(bn(conv(y, params["conv2_w"]), params["bn2_g"],
                       params["bn2_b"], params["bn2_m"], params["bn2_v"]), 0.0)
    return y


if __name__ == "__main__":
    # up(in_channels=4, out_channels=8, out_shape=21) on x of shape (2, 4, 8)
    N, Cin, Cout, L, out_shape = 2, 4, 8, 8, 21

    key = jax.random.PRNGKey(0)
    ks = jax.random.split(key, 13)
    x = jax.random.normal(ks[0], (N, Cin, L), jnp.float32)

    params = {
        "up_w":    0.3 * jax.random.normal(ks[1], (Cin, Cin, 2), jnp.float32),
        "up_b":    0.1 * jax.random.normal(ks[2], (Cin,), jnp.float32),
        "conv1_w": 0.3 * jax.random.normal(ks[3], (Cout, Cin, 3), jnp.float32),
        "conv2_w": 0.3 * jax.random.normal(ks[4], (Cout, Cout, 3), jnp.float32),
        "bn1_g":   1.0 + 0.1 * jax.random.normal(ks[5], (Cout,), jnp.float32),
        "bn1_b":   0.1 * jax.random.normal(ks[6], (Cout,), jnp.float32),
        "bn1_m":   0.1 * jax.random.normal(ks[7], (Cout,), jnp.float32),
        "bn1_v":   0.5 + jax.nn.softplus(jax.random.normal(ks[8], (Cout,), jnp.float32)),
        "bn2_g":   1.0 + 0.1 * jax.random.normal(ks[9], (Cout,), jnp.float32),
        "bn2_b":   0.1 * jax.random.normal(ks[10], (Cout,), jnp.float32),
        "bn2_m":   0.1 * jax.random.normal(ks[11], (Cout,), jnp.float32),
        "bn2_v":   0.5 + jax.nn.softplus(jax.random.normal(ks[12], (Cout,), jnp.float32)),
    }

    ref = ref_forward(x, params, out_shape)

    # f32 path (tight tolerance)
    out = jax.block_until_ready(up_forward(x, params, out_shape))
    assert out.shape == (N, Cout, out_shape), out.shape
    err = float(jnp.max(jnp.abs(out - ref)))
    assert jnp.allclose(out, ref, atol=5e-4, rtol=5e-4), err

    # bf16 MXU-operand path (v6e/v7x), f32 accumulation inside (loose tolerance)
    out_bf16 = jax.block_until_ready(
        up_forward(x, params, out_shape, compute_dtype=jnp.bfloat16))
    err_bf16 = float(jnp.max(jnp.abs(out_bf16 - ref)))
    assert jnp.allclose(out_bf16, ref, atol=1.5e-1, rtol=1e-1), err_bf16

    print("KERNEL_OK")
</pallas_src>

<mosaic_0001>
module attributes {stable_mosaic.version = 11 : i64} {
  func.func @_up_double_conv_kernel(%arg0: i32, %arg1: memref<1x16x128xf32, #tpu.memory_space<vmem>>, %arg2: memref<128x128xf32, #tpu.memory_space<vmem>>, %arg3: memref<1x128xf32, #tpu.memory_space<vmem>>, %arg4: memref<3x128x128xf32, #tpu.memory_space<vmem>>, %arg5: memref<1x128xf32, #tpu.memory_space<vmem>>, %arg6: memref<3x128x128xf32, #tpu.memory_space<vmem>>, %arg7: memref<1x128xf32, #tpu.memory_space<vmem>>, %arg8: memref<1x21x128xf32, #tpu.memory_space<vmem>>, %arg9: memref<23x128xf32, #tpu.memory_space<vmem>>) attributes {dimension_semantics = [#tpu.dimension_semantics<parallel>], iteration_bounds = array<i64: 2>, scalar_prefetch = 0 : i64, scratch_operands = 1 : i64, tpu.core_type = #tpu.core_type<tc>, window_params = [{transform_indices = @transform_0, window_bounds = array<i64: 1, 16, 128>}, {pipeline_mode = #tpu.pipeline_mode<synchronous>, transform_indices = @transform_1, window_bounds = array<i64: 128, 128>}, {pipeline_mode = #tpu.pipeline_mode<synchronous>, transform_indices = @transform_2, window_bounds = array<i64: 1, 128>}, {pipeline_mode = #tpu.pipeline_mode<synchronous>, transform_indices = @transform_3, window_bounds = array<i64: 3, 128, 128>}, {pipeline_mode = #tpu.pipeline_mode<synchronous>, transform_indices = @transform_4, window_bounds = array<i64: 1, 128>}, {pipeline_mode = #tpu.pipeline_mode<synchronous>, transform_indices = @transform_5, window_bounds = array<i64: 3, 128, 128>}, {pipeline_mode = #tpu.pipeline_mode<synchronous>, transform_indices = @transform_6, window_bounds = array<i64: 1, 128>}, {transform_indices = @transform_7, window_bounds = array<i64: 1, 21, 128>}]} {
    %cst = arith.constant 0.000000e+00 : f32
    %0 = vector.broadcast %cst : f32 to vector<23x128xf32>
    %c0 = arith.constant 0 : index
    %c0_0 = arith.constant 0 : index
    %1 = vector.load %arg9[%c0, %c0_0] : memref<23x128xf32, #tpu.memory_space<vmem>>, vector<23x128xf32>
    tpu.vector_store %arg9[%c0, %c0_0], %0 {strides = array<i32>} : memref<23x128xf32, #tpu.memory_space<vmem>>, vector<23x128xf32>,
    %c0_1 = arith.constant 0 : index
    %c0_2 = arith.constant 0 : index
    %c0_3 = arith.constant 0 : index
    %2 = vector.load %arg1[%c0_1, %c0_2, %c0_3] : memref<1x16x128xf32, #tpu.memory_space<vmem>>, vector<1x16x128xf32>
    %3 = vector.shape_cast %2 : vector<1x16x128xf32> to vector<16x128xf32>
    %c0_4 = arith.constant 0 : index
    %c0_5 = arith.constant 0 : index
    %4 = vector.load %arg2[%c0_4, %c0_5] : memref<128x128xf32, #tpu.memory_space<vmem>>, vector<128x128xf32>
    %cst_6 = arith.constant dense<0.000000e+00> : vector<16x128xf32>
    %5 = tpu.matmul %3, %4, %cst_6 {dimension_numbers = #tpu.dot_dimension_numbers<[1], [0], [0], [1], [0, 0, 1, 1], [], []>} : vector<16x128xf32>, vector<128x128xf32>, vector<16x128xf32> -> vector<16x128xf32>
    %c0_7 = arith.constant 0 : index
    %c0_8 = arith.constant 0 : index
    %6 = vector.load %arg3[%c0_7, %c0_8] : memref<1x128xf32, #tpu.memory_space<vmem>>, vector<1x128xf32>
    %7 = vector.broadcast %6 : vector<1x128xf32> to vector<16x128xf32>
    %8 = arith.addf %5, %7 : vector<16x128xf32>
    %c3 = arith.constant 3 : index
    %c0_9 = arith.constant 0 : index
    %9 = vector.load %arg9[%c3, %c0_9] : memref<23x128xf32, #tpu.memory_space<vmem>>, vector<16x128xf32>
    tpu.vector_store %arg9[%c3, %c0_9], %8 {strides = array<i32>} : memref<23x128xf32, #tpu.memory_space<vmem>>, vector<16x128xf32>,
    %c0_10 = arith.constant 0 : index
    %c0_11 = arith.constant 0 : index
    %10 = vector.load %arg9[%c0_10, %c0_11] : memref<23x128xf32, #tpu.memory_space<vmem>>, vector<21x128xf32>
    %c0_12 = arith.constant 0 : index
    %c0_13 = arith.constant 0 : index
    %c0_14 = arith.constant 0 : index
    %11 = vector.load %arg4[%c0_12, %c0_13, %c0_14] : memref<3x128x128xf32, #tpu.memory_space<vmem>>, vector<1x128x128xf32>
    %12 = vector.shape_cast %11 : vector<1x128x128xf32> to vector<128x128xf32>
    %cst_15 = arith.constant dense<0.000000e+00> : vector<21x128xf32>
    %13 = tpu.matmul %10, %12, %cst_15 {dimension_numbers = #tpu.dot_dimension_numbers<[1], [0], [0], [1], [0, 0, 1, 1], [], []>} : vector<21x128xf32>, vector<128x128xf32>, vector<21x128xf32> -> vector<21x128xf32>
    %c1 = arith.constant 1 : index
    %c0_16 = arith.constant 0 : index
    %14 = vector.load %arg9[%c1, %c0_16] : memref<23x128xf32, #tpu.memory_space<vmem>>, vector<21x128xf32>
    %c1_17 = arith.constant 1 : index
    %c0_18 = arith.constant 0 : index
    %c0_19 = arith.constant 0 : index
    %15 = vector.load %arg4[%c1_17, %c0_18, %c0_19] : memref<3x128x128xf32, #tpu.memory_space<vmem>>, vector<1x128x128xf32>
    %16 = vector.shape_cast %15 : vector<1x128x128xf32> to vector<128x128xf32>
    %cst_20 = arith.constant dense<0.000000e+00> : vector<21x128xf32>
    %17 = tpu.matmul %14, %16, %cst_20 {dimension_numbers = #tpu.dot_dimension_numbers<[1], [0], [0], [1], [0, 0, 1, 1], [], []>} : vector<21x128xf32>, vector<128x128xf32>, vector<21x128xf32> -> vector<21x128xf32>
    %18 = arith.addf %13, %17 : vector<21x128xf32>
    %c2 = arith.constant 2 : index
    %c0_21 = arith.constant 0 : index
    %19 = vector.load %arg9[%c2, %c0_21] : memref<23x128xf32, #tpu.memory_space<vmem>>, vector<21x128xf32>
    %c2_22 = arith.constant 2 : index
    %c0_23 = arith.constant 0 : index
    %c0_24 = arith.constant 0 : index
    %20 = vector.load %arg4[%c2_22, %c0_23, %c0_24] : memref<3x128x128xf32, #tpu.memory_space<vmem>>, vector<1x128x128xf32>
    %21 = vector.shape_cast %20 : vector<1x128x128xf32> to vector<128x128xf32>
    %cst_25 = arith.constant dense<0.000000e+00> : vector<21x128xf32>
    %22 = tpu.matmul %19, %21, %cst_25 {dimension_numbers = #tpu.dot_dimension_numbers<[1], [0], [0], [1], [0, 0, 1, 1], [], []>} : vector<21x128xf32>, vector<128x128xf32>, vector<21x128xf32> -> vector<21x128xf32>
    %23 = arith.addf %18, %22 : vector<21x128xf32>
    %c0_26 = arith.constant 0 : index
    %c0_27 = arith.constant 0 : index
    %24 = vector.load %arg5[%c0_26, %c0_27] : memref<1x128xf32, #tpu.memory_space<vmem>>, vector<1x128xf32>
    %25 = vector.broadcast %24 : vector<1x128xf32> to vector<21x128xf32>
    %26 = arith.addf %23, %25 : vector<21x128xf32>
    %cst_28 = arith.constant 0.000000e+00 : f32
    %27 = vector.broadcast %cst_28 : f32 to vector<21x128xf32>
    %28 = arith.maximumf %26, %27 : vector<21x128xf32>
    %c1_29 = arith.constant 1 : index
    %c0_30 = arith.constant 0 : index
    %29 = vector.load %arg9[%c1_29, %c0_30] : memref<23x128xf32, #tpu.memory_space<vmem>>, vector<21x128xf32>
    tpu.vector_store %arg9[%c1_29, %c0_30], %28 {strides = array<i32>} : memref<23x128xf32, #tpu.memory_space<vmem>>, vector<21x128xf32>,
    %c0_31 = arith.constant 0 : index
    %c0_32 = arith.constant 0 : index
    %30 = vector.load %arg9[%c0_31, %c0_32] : memref<23x128xf32, #tpu.memory_space<vmem>>, vector<21x128xf32>
    %c0_33 = arith.constant 0 : index
    %c0_34 = arith.constant 0 : index
    %c0_35 = arith.constant 0 : index
    %31 = vector.load %arg6[%c0_33, %c0_34, %c0_35] : memref<3x128x128xf32, #tpu.memory_space<vmem>>, vector<1x128x128xf32>
    %32 = vector.shape_cast %31 : vector<1x128x128xf32> to vector<128x128xf32>
    %cst_36 = arith.constant dense<0.000000e+00> : vector<21x128xf32>
    %33 = tpu.matmul %30, %32, %cst_36 {dimension_numbers = #tpu.dot_dimension_numbers<[1], [0], [0], [1], [0, 0, 1, 1], [], []>} : vector<21x128xf32>, vector<128x128xf32>, vector<21x128xf32> -> vector<21x128xf32>
    %c1_37 = arith.constant 1 : index
    %c0_38 = arith.constant 0 : index
    %34 = vector.load %arg9[%c1_37, %c0_38] : memref<23x128xf32, #tpu.memory_space<vmem>>, vector<21x128xf32>
    %c1_39 = arith.constant 1 : index
    %c0_40 = arith.constant 0 : index
    %c0_41 = arith.constant 0 : index
    %35 = vector.load %arg6[%c1_39, %c0_40, %c0_41] : memref<3x128x128xf32, #tpu.memory_space<vmem>>, vector<1x128x128xf32>
    %36 = vector.shape_cast %35 : vector<1x128x128xf32> to vector<128x128xf32>
    %cst_42 = arith.constant dense<0.000000e+00> : vector<21x128xf32>
    %37 = tpu.matmul %34, %36, %cst_42 {dimension_numbers = #tpu.dot_dimension_numbers<[1], [0], [0], [1], [0, 0, 1, 1], [], []>} : vector<21x128xf32>, vector<128x128xf32>, vector<21x128xf32> -> vector<21x128xf32>
    %38 = arith.addf %33, %37 : vector<21x128xf32>
    %c2_43 = arith.constant 2 : index
    %c0_44 = arith.constant 0 : index
    %39 = vector.load %arg9[%c2_43, %c0_44] : memref<23x128xf32, #tpu.memory_space<vmem>>, vector<21x128xf32>
    %c2_45 = arith.constant 2 : index
    %c0_46 = arith.constant 0 : index
    %c0_47 = arith.constant 0 : index
    %40 = vector.load %arg6[%c2_45, %c0_46, %c0_47] : memref<3x128x128xf32, #tpu.memory_space<vmem>>, vector<1x128x128xf32>
    %41 = vector.shape_cast %40 : vector<1x128x128xf32> to vector<128x128xf32>
    %cst_48 = arith.constant dense<0.000000e+00> : vector<21x128xf32>
    %42 = tpu.matmul %39, %41, %cst_48 {dimension_numbers = #tpu.dot_dimension_numbers<[1], [0], [0], [1], [0, 0, 1, 1], [], []>} : vector<21x128xf32>, vector<128x128xf32>, vector<21x128xf32> -> vector<21x128xf32>
    %43 = arith.addf %38, %42 : vector<21x128xf32>
    %c0_49 = arith.constant 0 : index
    %c0_50 = arith.constant 0 : index
    %44 = vector.load %arg7[%c0_49, %c0_50] : memref<1x128xf32, #tpu.memory_space<vmem>>, vector<1x128xf32>
    %45 = vector.broadcast %44 : vector<1x128xf32> to vector<21x128xf32>
    %46 = arith.addf %43, %45 : vector<21x128xf32>
    %cst_51 = arith.constant 0.000000e+00 : f32
    %47 = vector.broadcast %cst_51 : f32 to vector<21x128xf32>
    %48 = arith.maximumf %46, %47 : vector<21x128xf32>
    %c0_52 = arith.constant 0 : index
    %c0_53 = arith.constant 0 : index
    %c0_54 = arith.constant 0 : index
    %49 = vector.load %arg8[%c0_52, %c0_53, %c0_54] : memref<1x21x128xf32, #tpu.memory_space<vmem>>, vector<1x21x128xf32>
    %50 = vector.shape_cast %49 : vector<1x21x128xf32> to vector<21x128xf32>
    %51 = vector.shape_cast %48 : vector<21x128xf32> to vector<1x21x128xf32>
    tpu.vector_store %arg8[%c0_52, %c0_53, %c0_54], %51 {strides = array<i32>} : memref<1x21x128xf32, #tpu.memory_space<vmem>>, vector<1x21x128xf32>,
    return
  }
  func.func @transform_0(%arg0: i32) -> (i32, i32, i32) {
    %c0_i32 = arith.constant 0 : i32
    %c0_i32_0 = arith.constant 0 : i32
    %c0_i32_1 = arith.constant 0 : i32
    return %arg0, %c0_i32, %c0_i32_0 : i32, i32, i32
  }
  func.func @transform_1(%arg0: i32) -> (i32, i32) {
    %c0_i32 = arith.constant 0 : i32
    %c0_i32_0 = arith.constant 0 : i32
    %c0_i32_1 = arith.constant 0 : i32
    return %c0_i32, %c0_i32_0 : i32, i32
  }
  func.func @transform_2(%arg0: i32) -> (i32, i32) {
    %c0_i32 = arith.constant 0 : i32
    %c0_i32_0 = arith.constant 0 : i32
    %c0_i32_1 = arith.constant 0 : i32
    return %c0_i32, %c0_i32_0 : i32, i32
  }
  func.func @transform_3(%arg0: i32) -> (i32, i32, i32) {
    %c0_i32 = arith.constant 0 : i32
    %c0_i32_0 = arith.constant 0 : i32
    %c0_i32_1 = arith.constant 0 : i32
    %c0_i32_2 = arith.constant 0 : i32
    return %c0_i32, %c0_i32_0, %c0_i32_1 : i32, i32, i32
  }
  func.func @transform_4(%arg0: i32) -> (i32, i32) {
    %c0_i32 = arith.constant 0 : i32
    %c0_i32_0 = arith.constant 0 : i32
    %c0_i32_1 = arith.constant 0 : i32
    return %c0_i32, %c0_i32_0 : i32, i32
  }
  func.func @transform_5(%arg0: i32) -> (i32, i32, i32) {
    %c0_i32 = arith.constant 0 : i32
    %c0_i32_0 = arith.constant 0 : i32
    %c0_i32_1 = arith.constant 0 : i32
    %c0_i32_2 = arith.constant 0 : i32
    return %c0_i32, %c0_i32_0, %c0_i32_1 : i32, i32, i32
  }
  func.func @transform_6(%arg0: i32) -> (i32, i32) {
    %c0_i32 = arith.constant 0 : i32
    %c0_i32_0 = arith.constant 0 : i32
    %c0_i32_1 = arith.constant 0 : i32
    return %c0_i32, %c0_i32_0 : i32, i32
  }
  func.func @transform_7(%arg0: i32) -> (i32, i32, i32) {
    %c0_i32 = arith.constant 0 : i32
    %c0_i32_0 = arith.constant 0 : i32
    %c0_i32_1 = arith.constant 0 : i32
    return %arg0, %c0_i32, %c0_i32_0 : i32, i32, i32
  }
}

</mosaic_0001>

<llo_original>
// kernel: tpu_custom_call.1
$region0: #{tpu_custom_call.1}
  #allocation0 [shape = 'u32[]', space=smem, size = 0x4, offset = 0x4, fixed_abs, tag = 'smem constant byte address 0x4 - core index']
  #allocation1 [shape = 'u32[144,128]{1,0:T(1,128)}', space=vmem, size = 0x12000, scoped, tag = 'internal scratch']
  #allocation2 [shape = 'f32[23,128]{1,0:T(8,128)}', space=vmem, size = 0x3000, scoped, tag = 'scratch operand']
  %s0 = inlined_call_operand.hbm [shape: f32[2,16,128], index: 0, kind: input, shape index: {}]
  %s1 = inlined_call_operand.hbm [shape: f32[128,128], index: 1, kind: input, shape index: {}]
  %s2 = inlined_call_operand.vmem [shape: f32[1,128], index: 2, kind: input, shape index: {}]
  %s3 = inlined_call_operand.hbm [shape: f32[3,128,128], index: 3, kind: input, shape index: {}]
  %s4 = inlined_call_operand.vmem [shape: f32[1,128], index: 4, kind: input, shape index: {}]
  %s5 = inlined_call_operand.hbm [shape: f32[3,128,128], index: 5, kind: input, shape index: {}]
  %s6 = inlined_call_operand.vmem [shape: f32[1,128], index: 6, kind: input, shape index: {}]
  %s7 = inlined_call_operand.vmem [shape: f32[2,21,128], index: 7, kind: output, shape index: {}]
  %s8 = sld [smem:[#allocation0]]
  $region77: #{tpu_custom_call.1} parent=0
    _
  %s10 = ssub.s32 1, %s8
  %s11 = scalar_select 0, %s10, %s8
  $region1: #{tpu_custom_call.1} parent=0
    #allocation3 [shape = 'u8[16384]{0}', space=vmem, size = 0x4000, scoped, tag = 'input window, operand 0']
    #allocation4 [shape = 's32[2]{0}', space=sflag, size = 0x8, scoped, tag = 'scoped memory for tpu_custom_call.1']
    #allocation5 [shape = 'u8[65536]{0}', space=vmem, size = 0x10000, scoped, tag = 'input window, operand 1, single buffered']
    #allocation6 [shape = 's32[1]{0}', space=sflag, size = 0x4, scoped, tag = 'scoped memory for tpu_custom_call.1']
    #allocation7 [shape = 'u8[196608]{0}', space=vmem, size = 0x30000, scoped, tag = 'input window, operand 3, single buffered']
    #allocation8 [shape = 'u8[196608]{0}', space=vmem, size = 0x30000, scoped, tag = 'input window, operand 5, single buffered']
    #allocation9 [shape = 's32[1]{0}', space=sflag, size = 0x4, scoped, tag = 'scoped memory for tpu_custom_call.1']
    %12 = vsyncpa [#allocation4], 0
    %s13 = scalar_lea.sflag [#allocation4], 1
    %14 = vsyncpa %s13, 0
    %15 = vsyncpa [#allocation6], 0
    %16 = vsyncpa [#allocation9], 0
    loop: start=0, step=1, limit=4
    $region2: #{tpu_custom_call.1} parent=1 // loop_pre_header
      _
    $region3: #{tpu_custom_call.1} parent=1 // loop_header
      %s18 = sphi 0, %s22
      %p19 = scmp.ge.s32.totalorder %s18, 4
      %s28 = sphi 0, %s30
      %s31 = sphi 0, %s28
      %s32 = sphi 0, %s31
      %s48 = sphi 0, %s32
      %s52 = sphi 0, %s52
      %s54 = sphi 0, %s52
      %s55 = sphi 0, %s54
      %s69 = sphi 0, %s55
      %s73 = sphi 0, %s73
      %s75 = sphi 0, %s73
      %s76 = sphi 0, %s75
      %s90 = sphi 0, %s76
      %s94 = sphi 0, %s94
      %s96 = sphi 0, %s94
      %s97 = sphi 0, %s96
      %s111 = sphi 0, %s97
      %s115 = sphi 0, %s115
      %s117 = sphi 0, %s115
      %s118 = sphi 0, %s117
      %s132 = sphi 0, %s118
      %s136 = sphi 0, %s136
      %s138 = sphi 0, %s136
      %s139 = sphi 0, %s138
      %s153 = sphi 0, %s139
      %s157 = sphi 0, %s157
      %s159 = sphi 0, %s157
      %s160 = sphi 0, %s159
      %s174 = sphi 0, %s160
      %s180 = sphi 0, %s182
      %s183 = sphi 0, %s180
      %s184 = sphi 0, %s183
      %s200 = sphi 0, %s184
    $region4: #{tpu_custom_call.1} parent=1 // loop_header_branch
      %21 = sbr.rel (%p19) target = $region8
    $region5: #{tpu_custom_call.1} parent=1 // loop_body
      %s23 = ssub.s32 %s18, 1
      %s24 = ssub.s32 %s18, 2
      %s25 = sadd.s32 %s18, 1
      %s26 = ssub.s32 %s18, %s25
      %p27 = scmp.eq.s32.totalorder %s26, 0
      %s29 = sadd.s32 %s28, 1
      %s30 = scalar_select %p27, %s28, %s29
      %p33 = pneg %p27
      %p34 = scmp.eq.s32.totalorder %s18, 1
      %p35 = por %p33, %p34
      %p36 = scmp.ne.s32.totalorder %s28, %s31
      %p37 = scmp.eq.s32.totalorder %s18, 0
      %p38 = por %p36, %p37
      %p39 = scmp.ne.s32.totalorder %s28, %s31
      %p40 = scmp.eq.s32.totalorder %s23, 1
      %p41 = por %p39, %p40
      %p42 = scmp.ne.s32.totalorder %s31, %s32
      %p43 = scmp.eq.s32.totalorder %s23, 0
      %p44 = por %p42, %p43
      %p45 = scmp.ne.s32.totalorder %s31, %s32
      %p46 = scmp.eq.s32.totalorder %s24, 1
      %p47 = por %p45, %p46
      %p49 = scmp.ne.s32.totalorder %s32, %s48
      %p50 = scmp.eq.s32.totalorder %s24, 0
      %p51 = por %p49, %p50
      %s53 = sadd.s32 %s52, 1
      %p56 = scmp.eq.s32.totalorder %s18, 1
      %p57 = scmp.ne.s32.totalorder %s52, %s54
      %p58 = scmp.eq.s32.totalorder %s18, 0
      %p59 = por %p57, %p58
      %p60 = scmp.ne.s32.totalorder %s52, %s54
      %p61 = scmp.eq.s32.totalorder %s23, 1
      %p62 = por %p60, %p61
      %p63 = scmp.ne.s32.totalorder %s54, %s55
      %p64 = scmp.eq.s32.totalorder %s23, 0
      %p65 = por %p63, %p64
      %p66 = scmp.ne.s32.totalorder %s54, %s55
      %p67 = scmp.eq.s32.totalorder %s24, 1
      %p68 = por %p66, %p67
      %p70 = scmp.ne.s32.totalorder %s55, %s69
      %p71 = scmp.eq.s32.totalorder %s24, 0
      %p72 = por %p70, %p71
      %s74 = sadd.s32 %s73, 1
      %p77 = scmp.eq.s32.totalorder %s18, 1
      %p78 = scmp.ne.s32.totalorder %s73, %s75
      %p79 = scmp.eq.s32.totalorder %s18, 0
      %p80 = por %p78, %p79
      %p81 = scmp.ne.s32.totalorder %s73, %s75
      %p82 = scmp.eq.s32.totalorder %s23, 1
      %p83 = por %p81, %p82
      %p84 = scmp.ne.s32.totalorder %s75, %s76
      %p85 = scmp.eq.s32.totalorder %s23, 0
      %p86 = por %p84, %p85
      %p87 = scmp.ne.s32.totalorder %s75, %s76
      %p88 = scmp.eq.s32.totalorder %s24, 1
      %p89 = por %p87, %p88
      %p91 = scmp.ne.s32.totalorder %s76, %s90
      %p92 = scmp.eq.s32.totalorder %s24, 0
      %p93 = por %p91, %p92
      %s95 = sadd.s32 %s94, 1
      %p98 = scmp.eq.s32.totalorder %s18, 1
      %p99 = scmp.ne.s32.totalorder %s94, %s96
      %p100 = scmp.eq.s32.totalorder %s18, 0
      %p101 = por %p99, %p100
      %p102 = scmp.ne.s32.totalorder %s94, %s96
      %p103 = scmp.eq.s32.totalorder %s23, 1
      %p104 = por %p102, %p103
      %p105 = scmp.ne.s32.totalorder %s96, %s97
      %p106 = scmp.eq.s32.totalorder %s23, 0
      %p107 = por %p105, %p106
      %p108 = scmp.ne.s32.totalorder %s96, %s97
      %p109 = scmp.eq.s32.totalorder %s24, 1
      %p110 = por %p108, %p109
      %p112 = scmp.ne.s32.totalorder %s97, %s111
      %p113 = scmp.eq.s32.totalorder %s24, 0
      %p114 = por %p112, %p113
      %s116 = sadd.s32 %s115, 1
      %p119 = scmp.eq.s32.totalorder %s18, 1
      %p120 = scmp.ne.s32.totalorder %s115, %s117
      %p121 = scmp.eq.s32.totalorder %s18, 0
      %p122 = por %p120, %p121
      %p123 = scmp.ne.s32.totalorder %s115, %s117
      %p124 = scmp.eq.s32.totalorder %s23, 1
      %p125 = por %p123, %p124
      %p126 = scmp.ne.s32.totalorder %s117, %s118
      %p127 = scmp.eq.s32.totalorder %s23, 0
      %p128 = por %p126, %p127
      %p129 = scmp.ne.s32.totalorder %s117, %s118
      %p130 = scmp.eq.s32.totalorder %s24, 1
      %p131 = por %p129, %p130
      %p133 = scmp.ne.s32.totalorder %s118, %s132
      %p134 = scmp.eq.s32.totalorder %s24, 0
      %p135 = por %p133, %p134
      %s137 = sadd.s32 %s136, 1
      %p140 = scmp.eq.s32.totalorder %s18, 1
      %p141 = scmp.ne.s32.totalorder %s136, %s138
      %p142 = scmp.eq.s32.totalorder %s18, 0
      %p143 = por %p141, %p142
      %p144 = scmp.ne.s32.totalorder %s136, %s138
      %p145 = scmp.eq.s32.totalorder %s23, 1
      %p146 = por %p144, %p145
      %p147 = scmp.ne.s32.totalorder %s138, %s139
      %p148 = scmp.eq.s32.totalorder %s23, 0
      %p149 = por %p147, %p148
      %p150 = scmp.ne.s32.totalorder %s138, %s139
      %p151 = scmp.eq.s32.totalorder %s24, 1
      %p152 = por %p150, %p151
      %p154 = scmp.ne.s32.totalorder %s139, %s153
      %p155 = scmp.eq.s32.totalorder %s24, 0
      %p156 = por %p154, %p155
      %s158 = sadd.s32 %s157, 1
      %p161 = scmp.eq.s32.totalorder %s18, 1
      %p162 = scmp.ne.s32.totalorder %s157, %s159
      %p163 = scmp.eq.s32.totalorder %s18, 0
      %p164 = por %p162, %p163
      %p165 = scmp.ne.s32.totalorder %s157, %s159
      %p166 = scmp.eq.s32.totalorder %s23, 1
      %p167 = por %p165, %p166
      %p168 = scmp.ne.s32.totalorder %s159, %s160
      %p169 = scmp.eq.s32.totalorder %s23, 0
      %p170 = por %p168, %p169
      %p171 = scmp.ne.s32.totalorder %s159, %s160
      %p172 = scmp.eq.s32.totalorder %s24, 1
      %p173 = por %p171, %p172
      %p175 = scmp.ne.s32.totalorder %s160, %s174
      %p176 = scmp.eq.s32.totalorder %s24, 0
      %p177 = por %p175, %p176
      %s178 = ssub.s32 %s18, %s25
      %p179 = scmp.eq.s32.totalorder %s178, 0
      %s181 = sadd.s32 %s180, 1
      %s182 = scalar_select %p179, %s180, %s181
      %p185 = pneg %p179
      %p186 = scmp.eq.s32.totalorder %s18, 1
      %p187 = por %p185, %p186
      %p188 = scmp.ne.s32.totalorder %s180, %s183
      %p189 = scmp.eq.s32.totalorder %s18, 0
      %p190 = por %p188, %p189
      %p191 = scmp.ne.s32.totalorder %s180, %s183
      %p192 = scmp.eq.s32.totalorder %s23, 1
      %p193 = por %p191, %p192
      %p194 = scmp.ne.s32.totalorder %s183, %s184
      %p195 = scmp.eq.s32.totalorder %s23, 0
      %p196 = por %p194, %p195
      %p197 = scmp.ne.s32.totalorder %s183, %s184
      %p198 = scmp.eq.s32.totalorder %s24, 1
      %p199 = por %p197, %p198
      %p201 = scmp.ne.s32.totalorder %s184, %s200
      %p202 = scmp.eq.s32.totalorder %s24, 0
      %p203 = por %p201, %p202
      %p204 = scmp.le.s32.totalorder 1, %s18
      %p205 = scmp.lt.s32.totalorder %s18, 3
      %p206 = pnand %p204, %p205
      %p207 = pneg %p206
      // Predicated region
      $region9: #{tpu_custom_call.1} parent=5 // pred_check
        _
      $region10: #{tpu_custom_call.1} parent=5 // pred_check_branch
        %209 = sbr.rel (%p206) target = $region12
      $region11: #{tpu_custom_call.1} parent=5 // pred_region
        %s210 = ssub.s32 %s18, 1
        // Predicated region
        $region13: #{tpu_custom_call.1} parent=11 // pred_check
          %p211 = pneg %p65
        $region14: #{tpu_custom_call.1} parent=11 // pred_check_branch
          %213 = sbr.rel (%p211) target = $region16
        $region15: #{tpu_custom_call.1} parent=11 // pred_region
          %s215 = ssub.s32 2048, 2048
          %216 = vsyncadd [#allocation6], %s215
          %s217 = sshll.u32 [#allocation5], 4
          %s218 = int_to_ptr.vmem [resolvable:$true] %s217
          %223 = dma.hbm_to_vmem [thread:$0]  %s1, 2048, %s218, [#allocation6], 128, 128, 8
        $region16: #{tpu_custom_call.1} parent=11 // pred_fallthru
          _
        // Predicated region
        $region17: #{tpu_custom_call.1} parent=11 // pred_check
          %p224 = pneg %p86
        $region18: #{tpu_custom_call.1} parent=11 // pred_check_branch
          %226 = sbr.rel (%p224) target = $region20
        $region19: #{tpu_custom_call.1} parent=11 // pred_region
          _
        $region20: #{tpu_custom_call.1} parent=11 // pred_fallthru
          _
        // Predicated region
        $region21: #{tpu_custom_call.1} parent=11 // pred_check
          %p227 = pneg %p107
        $region22: #{tpu_custom_call.1} parent=11 // pred_check_branch
          %229 = sbr.rel (%p227) target = $region24
        $region23: #{tpu_custom_call.1} parent=11 // pred_region
          %s231 = ssub.s32 6144, 6144
          %232 = vsyncadd [#allocation6], %s231
          %s233 = sshll.u32 [#allocation7], 4
          %s234 = int_to_ptr.vmem [resolvable:$true] %s233
          %239 = dma.hbm_to_vmem [thread:$0]  %s3, 6144, %s234, [#allocation6], 128, 128, 8
        $region24: #{tpu_custom_call.1} parent=11 // pred_fallthru
          _
        // Predicated region
        $region25: #{tpu_custom_call.1} parent=11 // pred_check
          %p240 = pneg %p128
        $region26: #{tpu_custom_call.1} parent=11 // pred_check_branch
          %242 = sbr.rel (%p240) target = $region28
        $region27: #{tpu_custom_call.1} parent=11 // pred_region
          _
        $region28: #{tpu_custom_call.1} parent=11 // pred_fallthru
          _
        // Predicated region
        $region29: #{tpu_custom_call.1} parent=11 // pred_check
          %p243 = pneg %p149
        $region30: #{tpu_custom_call.1} parent=11 // pred_check_branch
          %245 = sbr.rel (%p243) target = $region32
        $region31: #{tpu_custom_call.1} parent=11 // pred_region
          %s247 = ssub.s32 6144, 6144
          %248 = vsyncadd [#allocation9], %s247
          %s249 = sshll.u32 [#allocation8], 4
          %s250 = int_to_ptr.vmem [resolvable:$true] %s249
          %255 = dma.hbm_to_vmem [thread:$0]  %s5, 6144, %s250, [#allocation9], 128, 128, 8
        $region32: #{tpu_custom_call.1} parent=11 // pred_fallthru
          _
        // Predicated region
        $region33: #{tpu_custom_call.1} parent=11 // pred_check
          %p256 = pneg %p170
        $region34: #{tpu_custom_call.1} parent=11 // pred_check_branch
          %258 = sbr.rel (%p256) target = $region36
        $region35: #{tpu_custom_call.1} parent=11 // pred_region
          _
        $region36: #{tpu_custom_call.1} parent=11 // pred_fallthru
          _
      $region12: #{tpu_custom_call.1} parent=5 // pred_fallthru
        _
      %p259 = scmp.lt.s32.totalorder %s18, 2
      // Predicated region
      $region37: #{tpu_custom_call.1} parent=5 // pred_check
        %p260 = pneg %p259
      $region38: #{tpu_custom_call.1} parent=5 // pred_check_branch
        %262 = sbr.rel (%p260) target = $region40
      $region39: #{tpu_custom_call.1} parent=5 // pred_region
        // Predicated region
        $region41: #{tpu_custom_call.1} parent=39 // pred_check
          %p263 = pneg %p38
        $region42: #{tpu_custom_call.1} parent=39 // pred_check_branch
          %265 = sbr.rel (%p263) target = $region44
        $region43: #{tpu_custom_call.1} parent=39 // pred_region
          %s266 = sand.u32 %s28, 1
          %s267 = scalar_lea.sflag [#allocation4], %s266
          %s268 = sand.u32 %s28, 1
          %s269 = smul.addr %s268, 16
          %s270 = scalar_lea.vmem [#allocation3], %s269
          %s272 = ssub.s32 256, 256
          %273 = vsyncadd %s267, %s272
          %s274 = smul.addr %s18, 2
          %s275 = smul.addr %s274, 128
          %s276 = scalar_lea.hbm %s0, %s275
          %s277 = sshll.u32 %s270, 4
          %s278 = int_to_ptr.vmem [resolvable:$true] %s277
          %283 = dma.hbm_to_vmem [thread:$0]  %s276, 256, %s278, %s267, 128, 128, 8
        $region44: #{tpu_custom_call.1} parent=39 // pred_fallthru
          _
      $region40: #{tpu_custom_call.1} parent=5 // pred_fallthru
        _
      %p284 = scmp.le.s32.totalorder 1, %s18
      %p285 = scmp.lt.s32.totalorder %s18, 3
      %p286 = pnand %p284, %p285
      %p287 = pneg %p286
      // Predicated region
      $region45: #{tpu_custom_call.1} parent=5 // pred_check
        _
      $region46: #{tpu_custom_call.1} parent=5 // pred_check_branch
        %289 = sbr.rel (%p286) target = $region48
      $region47: #{tpu_custom_call.1} parent=5 // pred_region
        %s290 = ssub.s32 %s18, 1
        %s291 = sand.u32 %s31, 1
        %s292 = scalar_lea.sflag [#allocation4], %s291
        %s293 = sand.u32 %s31, 1
        %s294 = smul.addr %s293, 16
        %s295 = scalar_lea.vmem [#allocation3], %s294
        // Predicated region
        $region49: #{tpu_custom_call.1} parent=47 // pred_check
          %p296 = pneg %p44
        $region50: #{tpu_custom_call.1} parent=47 // pred_check_branch
          %298 = sbr.rel (%p296) target = $region52
        $region51: #{tpu_custom_call.1} parent=47 // pred_region
          %299 = dma.done %s292, 256
        $region52: #{tpu_custom_call.1} parent=47 // pred_fallthru
          _
        // Predicated region
        $region53: #{tpu_custom_call.1} parent=47 // pred_check
          %p300 = pneg %p65
        $region54: #{tpu_custom_call.1} parent=47 // pred_check_branch
          %302 = sbr.rel (%p300) target = $region56
        $region55: #{tpu_custom_call.1} parent=47 // pred_region
          %303 = dma.done [#allocation6], 2048
        $region56: #{tpu_custom_call.1} parent=47 // pred_fallthru
          _
        // Predicated region
        $region57: #{tpu_custom_call.1} parent=47 // pred_check
          %p304 = pneg %p107
        $region58: #{tpu_custom_call.1} parent=47 // pred_check_branch
          %306 = sbr.rel (%p304) target = $region60
        $region59: #{tpu_custom_call.1} parent=47 // pred_region
          %307 = dma.done [#allocation6], 6144
        $region60: #{tpu_custom_call.1} parent=47 // pred_fallthru
          _
        // Predicated region
        $region61: #{tpu_custom_call.1} parent=47 // pred_check
          %p308 = pneg %p149
        $region62: #{tpu_custom_call.1} parent=47 // pred_check_branch
          %310 = sbr.rel (%p308) target = $region64
        $region63: #{tpu_custom_call.1} parent=47 // pred_region
          %311 = dma.done [#allocation9], 6144
        $region64: #{tpu_custom_call.1} parent=47 // pred_fallthru
          _
        %s312 = sand.u32 %s31, 1
        %s313 = scalar_lea.sflag [#allocation4], %s312
        %s314 = sand.u32 %s31, 1
        %s315 = smul.addr %s314, 16
        %s316 = scalar_lea.vmem [#allocation3], %s315
        %p317 = pneg %p44
        %p318 = pneg %p41
        %p319 = pneg %p65
        %p320 = pneg %p62
        %p321 = pneg %p86
        %p322 = pneg %p83
        %p323 = pneg %p107
        %p324 = pneg %p104
        %p325 = pneg %p128
        %p326 = pneg %p125
        %p327 = pneg %p149
        %p328 = pneg %p146
        %p329 = pneg %p170
        %p330 = pneg %p167
        %p331 = pneg %p196
        %p332 = pneg %p193
        %p333 = scmp.lt.s32.totalorder %s23, 1
        %s334 = scalar_select %p333, %s23, 1
        %s335 = smul.addr %s334, 3
        %s336 = smul.addr %s335, 8
        %s337 = scalar_lea.vmem %s7, %s336
        %p338 = scmp.lt.s32.totalorder %s23, 1
        %s339 = scalar_select %p338, %s23, 1
        %s340 = smul.addr %s339, 3
        %s341 = smul.addr %s340, 8
        %s342 = scalar_lea.vmem %s7, %s341
        %343 = vst [vmem:[#allocation2] sm:$0xff] 0.0
        %344 = vst [vmem:[#allocation2 + $0x8] sm:$0xff] 0.0
        %345 = vst [vmem:[#allocation2 + $0x10] sm:$0x7f] 0.0
        %v346 = vld [vmem:[%s295] sm:$0xff]
        %v347 = vld [vmem:[%s295 + $0x8] sm:$0xff]
        %v348 = vld [vmem:[#allocation5] sm:$0xff]
        %v349 = vld [vmem:[#allocation5 + $0x8] sm:$0xff]
        %v350 = vld [vmem:[#allocation5 + $0x10] sm:$0xff]
        %v351 = vld [vmem:[#allocation5 + $0x18] sm:$0xff]
        %v352 = vld [vmem:[#allocation5 + $0x20] sm:$0xff]
        %v353 = vld [vmem:[#allocation5 + $0x28] sm:$0xff]
        %v354 = vld [vmem:[#allocation5 + $0x30] sm:$0xff]
        %v355 = vld [vmem:[#allocation5 + $0x38] sm:$0xff]
        %v356 = vld [vmem:[#allocation5 + $0x40] sm:$0xff]
        %v357 = vld [vmem:[#allocation5 + $0x48] sm:$0xff]
        %v358 = vld [vmem:[#allocation5 + $0x50] sm:$0xff]
        %v359 = vld [vmem:[#allocation5 + $0x58] sm:$0xff]
        %v360 = vld [vmem:[#allocation5 + $0x60] sm:$0xff]
        %v361 = vld [vmem:[#allocation5 + $0x68] sm:$0xff]
        %v362 = vld [vmem:[#allocation5 + $0x70] sm:$0xff]
        %v363 = vld [vmem:[#allocation5 + $0x78] sm:$0xff]
        %v364 = vld [vmem:[%s2] sm:$0x1]
        %v366 = vlaneseq
        %v367 = vshrl.u32 %v366, 7
        %v368 = vsub.s32 0, %v367
        %v369 = vrot.slane %v364, %v368
        %371 = vmatprep.subr.mxu0 0.0
        %372 = vmatpush1.msra.mxu0 %v348
        %373 = vmatprep.subr.mxu0 0.0
        %374 = vmatpush1.msra.mxu0 %v349
        %375 = vmatprep.subr.mxu0 0.0
        %376 = vmatpush1.msra.mxu0 %v350
        %377 = vmatprep.subr.mxu0 0.0
        %378 = vmatpush1.msra.mxu0 %v351
        %379 = vmatprep.subr.mxu0 0.0
        %380 = vmatpush1.msra.mxu0 %v352
        %381 = vmatprep.subr.mxu0 0.0
        %382 = vmatpush1.msra.mxu0 %v353
        %383 = vmatprep.subr.mxu0 0.0
        %384 = vmatpush1.msra.mxu0 %v354
        %385 = vmatprep.subr.mxu0 0.0
        %386 = vmatpush1.msra.mxu0 %v355
        %387 = vmatprep.subr.mxu0 0.0
        %388 = vmatpush1.msra.mxu0 %v356
        %389 = vmatprep.subr.mxu0 0.0
        %390 = vmatpush1.msra.mxu0 %v357
        %391 = vmatprep.subr.mxu0 0.0
        %392 = vmatpush1.msra.mxu0 %v358
        %393 = vmatprep.subr.mxu0 0.0
        %394 = vmatpush1.msra.mxu0 %v359
        %395 = vmatprep.subr.mxu0 0.0
        %396 = vmatpush1.msra.mxu0 %v360
        %397 = vmatprep.subr.mxu0 0.0
        %398 = vmatpush1.msra.mxu0 %v361
        %399 = vmatprep.subr.mxu0 0.0
        %400 = vmatpush1.msra.mxu0 %v362
        %401 = vmatprep.subr.mxu0 0.0
        %402 = vmatpush1.msra.mxu0 %v363
        %403 = vmatprep.subr.mxu0 0.0
        %404 = vmatpush1.msra.mxu0 0.0
        %405 = vmatprep.subr.mxu0 0.0
        %406 = vmatpush1.msra.mxu0 0.0
        %407 = vmatprep.subr.mxu0 0.0
        %408 = vmatpush1.msra.mxu0 0.0
        %409 = vmatprep.subr.mxu0 0.0
        %410 = vmatpush1.msra.mxu0 0.0
        %411 = vmatprep.subr.mxu0 0.0
        %412 = vmatpush1.msra.mxu0 0.0
        %413 = vmatprep.subr.mxu0 0.0
        %414 = vmatpush1.msra.mxu0 0.0
        %415 = vmatprep.subr.mxu0 0.0
        %416 = vmatpush1.msra.mxu0 0.0
        %417 = vmatprep.subr.mxu0 0.0
        %418 = vmatpush1.msra.mxu0 0.0
        %419 = vmatprep.subr.mxu0 0.0
        %420 = vmatpush1.msra.mxu0 0.0
        %421 = vmatprep.subr.mxu0 0.0
        %422 = vmatpush1.msra.mxu0 0.0
        %423 = vmatprep.subr.mxu0 0.0
        %424 = vmatpush1.msra.mxu0 0.0
        %425 = vmatprep.subr.mxu0 0.0
        %426 = vmatpush1.msra.mxu0 0.0
        %427 = vmatprep.subr.mxu0 0.0
        %428 = vmatpush1.msra.mxu0 0.0
        %429 = vmatprep.subr.mxu0 0.0
        %430 = vmatpush1.msra.mxu0 0.0
        %431 = vmatprep.subr.mxu0 0.0
        %432 = vmatpush1.msra.mxu0 0.0
        %433 = vmatprep.subr.mxu0 0.0
        %434 = vmatpush1.msra.mxu0 0.0
        %435 = vmatprep.mubr.f32.mxu0 0.0
        %436 = vmatmul.mubr.f32.gmra.mrb[0].mxu0 %v346
        %v437 = vpop.f32.mrb[0].mxu0
        %v438 = vadd.f32 %v369, %v437
        %v439 = vpop.f32.mrb[0].mxu0
        %440 = vmatprep.mubr.f32.mxu0 0.0
        %441 = vmatmul.mubr.f32.gmra.mrb[0].mxu0 %v347
        %v442 = vpop.f32.mrb[0].mxu0
        %v443 = vadd.f32 %v369, %v442
        %v444 = vpop.f32.mrb[0].mxu0
        %445 = vdwg.mxu0
        %446 = vst [vmem:[#allocation2 + $0x3] sm:$0xff] %v438
        %447 = vst [vmem:[#allocation2 + $0xb] sm:$0xff] %v443
        %v448 = vld [vmem:[#allocation2] sm:$0xff]
        %v449 = vld [vmem:[#allocation2 + $0x8] sm:$0xff]
        %v450 = vld [vmem:[#allocation2 + $0x10] sm:$0x1f]
        %v451 = vld [vmem:[#allocation7] sm:$0xff]
        %v452 = vld [vmem:[#allocation7 + $0x8] sm:$0xff]
        %v453 = vld [vmem:[#allocation7 + $0x10] sm:$0xff]
        %v454 = vld [vmem:[#allocation7 + $0x18] sm:$0xff]
        %v455 = vld [vmem:[#allocation7 + $0x20] sm:$0xff]
        %v456 = vld [vmem:[#allocation7 + $0x28] sm:$0xff]
        %v457 = vld [vmem:[#allocation7 + $0x30] sm:$0xff]
        %v458 = vld [vmem:[#allocation7 + $0x38] sm:$0xff]
        %v459 = vld [vmem:[#allocation7 + $0x40] sm:$0xff]
        %v460 = vld [vmem:[#allocation7 + $0x48] sm:$0xff]
        %v461 = vld [vmem:[#allocation7 + $0x50] sm:$0xff]
        %v462 = vld [vmem:[#allocation7 + $0x58] sm:$0xff]
        %v463 = vld [vmem:[#allocation7 + $0x60] sm:$0xff]
        %v464 = vld [vmem:[#allocation7 + $0x68] sm:$0xff]
        %v465 = vld [vmem:[#allocation7 + $0x70] sm:$0xff]
        %v466 = vld [vmem:[#allocation7 + $0x78] sm:$0xff]
        %v467 = vld [vmem:[#allocation2 + $0x1] sm:$0xff]
        %v468 = vld [vmem:[#allocation2 + $0x9] sm:$0xff]
        %v469 = vld [vmem:[#allocation2 + $0x11] sm:$0x1f]
        %s470 = scalar_lea.vmem [#allocation7], 128
        %v471 = vld [vmem:[%s470] sm:$0xff]
        %v472 = vld [vmem:[%s470 + $0x8] sm:$0xff]
        %v473 = vld [vmem:[%s470 + $0x10] sm:$0xff]
        %v474 = vld [vmem:[%s470 + $0x18] sm:$0xff]
        %v475 = vld [vmem:[%s470 + $0x20] sm:$0xff]
        %v476 = vld [vmem:[%s470 + $0x28] sm:$0xff]
        %v477 = vld [vmem:[%s470 + $0x30] sm:$0xff]
        %v478 = vld [vmem:[%s470 + $0x38] sm:$0xff]
        %v479 = vld [vmem:[%s470 + $0x40] sm:$0xff]
        %v480 = vld [vmem:[%s470 + $0x48] sm:$0xff]
        %v481 = vld [vmem:[%s470 + $0x50] sm:$0xff]
        %v482 = vld [vmem:[%s470 + $0x58] sm:$0xff]
        %v483 = vld [vmem:[%s470 + $0x60] sm:$0xff]
        %v484 = vld [vmem:[%s470 + $0x68] sm:$0xff]
        %v485 = vld [vmem:[%s470 + $0x70] sm:$0xff]
        %v486 = vld [vmem:[%s470 + $0x78] sm:$0xff]
        %487 = vmatprep.subr.mxu0 0.0
        %488 = vmatpush1.msra.mxu0 %v471
        %489 = vmatprep.subr.mxu0 0.0
        %490 = vmatpush1.msra.mxu0 %v472
        %491 = vmatprep.subr.mxu0 0.0
        %492 = vmatpush1.msra.mxu0 %v473
        %493 = vmatprep.subr.mxu0 0.0
        %494 = vmatpush1.msra.mxu0 %v474
        %495 = vmatprep.subr.mxu0 0.0
        %496 = vmatpush1.msra.mxu0 %v475
        %497 = vmatprep.subr.mxu0 0.0
        %498 = vmatpush1.msra.mxu0 %v476
        %499 = vmatprep.subr.mxu0 0.0
        %500 = vmatpush1.msra.mxu0 %v477
        %501 = vmatprep.subr.mxu0 0.0
        %502 = vmatpush1.msra.mxu0 %v478
        %503 = vmatprep.subr.mxu0 0.0
        %504 = vmatpush1.msra.mxu0 %v479
        %505 = vmatprep.subr.mxu0 0.0
        %506 = vmatpush1.msra.mxu0 %v480
        %507 = vmatprep.subr.mxu0 0.0
        %508 = vmatpush1.msra.mxu0 %v481
        %509 = vmatprep.subr.mxu0 0.0
        %510 = vmatpush1.msra.mxu0 %v482
        %511 = vmatprep.subr.mxu0 0.0
        %512 = vmatpush1.msra.mxu0 %v483
        %513 = vmatprep.subr.mxu0 0.0
        %514 = vmatpush1.msra.mxu0 %v484
        %515 = vmatprep.subr.mxu0 0.0
        %516 = vmatpush1.msra.mxu0 %v485
        %517 = vmatprep.subr.mxu0 0.0
        %518 = vmatpush1.msra.mxu0 %v486
        %519 = vmatprep.subr.mxu0 0.0
        %520 = vmatpush1.msra.mxu0 0.0
        %521 = vmatprep.subr.mxu0 0.0
        %522 = vmatpush1.msra.mxu0 0.0
        %523 = vmatprep.subr.mxu0 0.0
        %524 = vmatpush1.msra.mxu0 0.0
        %525 = vmatprep.subr.mxu0 0.0
        %526 = vmatpush1.msra.mxu0 0.0
        %527 = vmatprep.subr.mxu0 0.0
        %528 = vmatpush1.msra.mxu0 0.0
        %529 = vmatprep.subr.mxu0 0.0
        %530 = vmatpush1.msra.mxu0 0.0
        %531 = vmatprep.subr.mxu0 0.0
        %532 = vmatpush1.msra.mxu0 0.0
        %533 = vmatprep.subr.mxu0 0.0
        %534 = vmatpush1.msra.mxu0 0.0
        %535 = vmatprep.subr.mxu0 0.0
        %536 = vmatpush1.msra.mxu0 0.0
        %537 = vmatprep.subr.mxu0 0.0
        %538 = vmatpush1.msra.mxu0 0.0
        %539 = vmatprep.subr.mxu0 0.0
        %540 = vmatpush1.msra.mxu0 0.0
        %541 = vmatprep.subr.mxu0 0.0
        %542 = vmatpush1.msra.mxu0 0.0
        %543 = vmatprep.subr.mxu0 0.0
        %544 = vmatpush1.msra.mxu0 0.0
        %545 = vmatprep.subr.mxu0 0.0
        %546 = vmatpush1.msra.mxu0 0.0
        %547 = vmatprep.subr.mxu0 0.0
        %548 = vmatpush1.msra.mxu0 0.0
        %549 = vmatprep.subr.mxu0 0.0
        %550 = vmatpush1.msra.mxu0 0.0
        %551 = vmatprep.mubr.f32.mxu0 0.0
        %552 = vmatmul.mubr.f32.gmra.mrb[0].mxu0 %v467
        %v553 = vpop.f32.mrb[0].mxu0
        %v554 = vadd.f32 0.0, %v553
        %v555 = vpop.f32.mrb[0].mxu0
        %556 = vmatprep.mubr.f32.mxu0 0.0
        %557 = vmatmul.mubr.f32.gmra.mrb[0].mxu0 %v468
        %v558 = vpop.f32.mrb[0].mxu0
        %v559 = vadd.f32 0.0, %v558
        %v560 = vpop.f32.mrb[0].mxu0
        %561 = vmatprep.mubr.f32.mxu0 0.0
        %562 = vmatmul.mubr.f32.gmra.mrb[0].mxu0 %v469
        %v563 = vpop.f32.mrb[0].mxu0
        %v564 = vadd.f32 0.0, %v563
        %v565 = vpop.f32.mrb[0].mxu0
        %566 = vdwg.mxu0
        %567 = vmatprep.subr.mxu0 0.0
        %568 = vmatpush1.msra.mxu0 %v451
        %569 = vmatprep.subr.mxu0 0.0
        %570 = vmatpush1.msra.mxu0 %v452
        %571 = vmatprep.subr.mxu0 0.0
        %572 = vmatpush1.msra.mxu0 %v453
        %573 = vmatprep.subr.mxu0 0.0
        %574 = vmatpush1.msra.mxu0 %v454
        %575 = vmatprep.subr.mxu0 0.0
        %576 = vmatpush1.msra.mxu0 %v455
        %577 = vmatprep.subr.mxu0 0.0
        %578 = vmatpush1.msra.mxu0 %v456
        %579 = vmatprep.subr.mxu0 0.0
        %580 = vmatpush1.msra.mxu0 %v457
        %581 = vmatprep.subr.mxu0 0.0
        %582 = vmatpush1.msra.mxu0 %v458
        %583 = vmatprep.subr.mxu0 0.0
        %584 = vmatpush1.msra.mxu0 %v459
        %585 = vmatprep.subr.mxu0 0.0
        %586 = vmatpush1.msra.mxu0 %v460
        %587 = vmatprep.subr.mxu0 0.0
        %588 = vmatpush1.msra.mxu0 %v461
        %589 = vmatprep.subr.mxu0 0.0
        %590 = vmatpush1.msra.mxu0 %v462
        %591 = vmatprep.subr.mxu0 0.0
        %592 = vmatpush1.msra.mxu0 %v463
        %593 = vmatprep.subr.mxu0 0.0
        %594 = vmatpush1.msra.mxu0 %v464
        %595 = vmatprep.subr.mxu0 0.0
        %596 = vmatpush1.msra.mxu0 %v465
        %597 = vmatprep.subr.mxu0 0.0
        %598 = vmatpush1.msra.mxu0 %v466
        %599 = vmatprep.subr.mxu0 0.0
        %600 = vmatpush1.msra.mxu0 0.0
        %601 = vmatprep.subr.mxu0 0.0
        %602 = vmatpush1.msra.mxu0 0.0
        %603 = vmatprep.subr.mxu0 0.0
        %604 = vmatpush1.msra.mxu0 0.0
        %605 = vmatprep.subr.mxu0 0.0
        %606 = vmatpush1.msra.mxu0 0.0
        %607 = vmatprep.subr.mxu0 0.0
        %608 = vmatpush1.msra.mxu0 0.0
        %609 = vmatprep.subr.mxu0 0.0
        %610 = vmatpush1.msra.mxu0 0.0
        %611 = vmatprep.subr.mxu0 0.0
        %612 = vmatpush1.msra.mxu0 0.0
        %613 = vmatprep.subr.mxu0 0.0
        %614 = vmatpush1.msra.mxu0 0.0
        %615 = vmatprep.subr.mxu0 0.0
        %616 = vmatpush1.msra.mxu0 0.0
        %617 = vmatprep.subr.mxu0 0.0
        %618 = vmatpush1.msra.mxu0 0.0
        %619 = vmatprep.subr.mxu0 0.0
        %620 = vmatpush1.msra.mxu0 0.0
        %621 = vmatprep.subr.mxu0 0.0
        %622 = vmatpush1.msra.mxu0 0.0
        %623 = vmatprep.subr.mxu0 0.0
        %624 = vmatpush1.msra.mxu0 0.0
        %625 = vmatprep.subr.mxu0 0.0
        %626 = vmatpush1.msra.mxu0 0.0
        %627 = vmatprep.subr.mxu0 0.0
        %628 = vmatpush1.msra.mxu0 0.0
        %629 = vmatprep.subr.mxu0 0.0
        %630 = vmatpush1.msra.mxu0 0.0
        %631 = vmatprep.mubr.f32.mxu0 0.0
        %632 = vmatmul.mubr.f32.gmra.mrb[0].mxu0 %v448
        %v633 = vpop.f32.mrb[0].mxu0
        %v634 = vadd.f32 %v554, %v633
        %v635 = vpop.f32.mrb[0].mxu0
        %636 = vmatprep.mubr.f32.mxu0 0.0
        %637 = vmatmul.mubr.f32.gmra.mrb[0].mxu0 %v449
        %v638 = vpop.f32.mrb[0].mxu0
        %v639 = vadd.f32 %v559, %v638
        %v640 = vpop.f32.mrb[0].mxu0
        %641 = vmatprep.mubr.f32.mxu0 0.0
        %642 = vmatmul.mubr.f32.gmra.mrb[0].mxu0 %v450
        %v643 = vpop.f32.mrb[0].mxu0
        %v644 = vadd.f32 %v564, %v643
        %v645 = vpop.f32.mrb[0].mxu0
        %646 = vdwg.mxu0
        %v647 = vld [vmem:[#allocation2 + $0x2] sm:$0xff]
        %v648 = vld [vmem:[#allocation2 + $0xa] sm:$0xff]
        %v649 = vld [vmem:[#allocation2 + $0x12] sm:$0x1f]
        %s650 = scalar_lea.vmem [#allocation7], 256
        %v651 = vld [vmem:[%s650] sm:$0xff]
        %v652 = vld [vmem:[%s650 + $0x8] sm:$0xff]
        %v653 = vld [vmem:[%s650 + $0x10] sm:$0xff]
        %v654 = vld [vmem:[%s650 + $0x18] sm:$0xff]
        %v655 = vld [vmem:[%s650 + $0x20] sm:$0xff]
        %v656 = vld [vmem:[%s650 + $0x28] sm:$0xff]
        %v657 = vld [vmem:[%s650 + $0x30] sm:$0xff]
        %v658 = vld [vmem:[%s650 + $0x38] sm:$0xff]
        %v659 = vld [vmem:[%s650 + $0x40] sm:$0xff]
        %v660 = vld [vmem:[%s650 + $0x48] sm:$0xff]
        %v661 = vld [vmem:[%s650 + $0x50] sm:$0xff]
        %v662 = vld [vmem:[%s650 + $0x58] sm:$0xff]
        %v663 = vld [vmem:[%s650 + $0x60] sm:$0xff]
        %v664 = vld [vmem:[%s650 + $0x68] sm:$0xff]
        %v665 = vld [vmem:[%s650 + $0x70] sm:$0xff]
        %v666 = vld [vmem:[%s650 + $0x78] sm:$0xff]
        %667 = vmatprep.subr.mxu0 0.0
        %668 = vmatpush1.msra.mxu0 %v651
        %669 = vmatprep.subr.mxu0 0.0
        %670 = vmatpush1.msra.mxu0 %v652
        %671 = vmatprep.subr.mxu0 0.0
        %672 = vmatpush1.msra.mxu0 %v653
        %673 = vmatprep.subr.mxu0 0.0
        %674 = vmatpush1.msra.mxu0 %v654
        %675 = vmatprep.subr.mxu0 0.0
        %676 = vmatpush1.msra.mxu0 %v655
        %677 = vmatprep.subr.mxu0 0.0
        %678 = vmatpush1.msra.mxu0 %v656
        %679 = vmatprep.subr.mxu0 0.0
        %680 = vmatpush1.msra.mxu0 %v657
        %681 = vmatprep.subr.mxu0 0.0
        %682 = vmatpush1.msra.mxu0 %v658
        %683 = vmatprep.subr.mxu0 0.0
        %684 = vmatpush1.msra.mxu0 %v659
        %685 = vmatprep.subr.mxu0 0.0
        %686 = vmatpush1.msra.mxu0 %v660
        %687 = vmatprep.subr.mxu0 0.0
        %688 = vmatpush1.msra.mxu0 %v661
        %689 = vmatprep.subr.mxu0 0.0
        %690 = vmatpush1.msra.mxu0 %v662
        %691 = vmatprep.subr.mxu0 0.0
        %692 = vmatpush1.msra.mxu0 %v663
        %693 = vmatprep.subr.mxu0 0.0
        %694 = vmatpush1.msra.mxu0 %v664
        %695 = vmatprep.subr.mxu0 0.0
        %696 = vmatpush1.msra.mxu0 %v665
        %697 = vmatprep.subr.mxu0 0.0
        %698 = vmatpush1.msra.mxu0 %v666
        %699 = vmatprep.subr.mxu0 0.0
        %700 = vmatpush1.msra.mxu0 0.0
        %701 = vmatprep.subr.mxu0 0.0
        %702 = vmatpush1.msra.mxu0 0.0
        %703 = vmatprep.subr.mxu0 0.0
        %704 = vmatpush1.msra.mxu0 0.0
        %705 = vmatprep.subr.mxu0 0.0
        %706 = vmatpush1.msra.mxu0 0.0
        %707 = vmatprep.subr.mxu0 0.0
        %708 = vmatpush1.msra.mxu0 0.0
        %709 = vmatprep.subr.mxu0 0.0
        %710 = vmatpush1.msra.mxu0 0.0
        %711 = vmatprep.subr.mxu0 0.0
        %712 = vmatpush1.msra.mxu0 0.0
        %713 = vmatprep.subr.mxu0 0.0
        %714 = vmatpush1.msra.mxu0 0.0
        %715 = vmatprep.subr.mxu0 0.0
        %716 = vmatpush1.msra.mxu0 0.0
        %717 = vmatprep.subr.mxu0 0.0
        %718 = vmatpush1.msra.mxu0 0.0
        %719 = vmatprep.subr.mxu0 0.0
        %720 = vmatpush1.msra.mxu0 0.0
        %721 = vmatprep.subr.mxu0 0.0
        %722 = vmatpush1.msra.mxu0 0.0
        %723 = vmatprep.subr.mxu0 0.0
        %724 = vmatpush1.msra.mxu0 0.0
        %725 = vmatprep.subr.mxu0 0.0
        %726 = vmatpush1.msra.mxu0 0.0
        %727 = vmatprep.subr.mxu0 0.0
        %728 = vmatpush1.msra.mxu0 0.0
        %729 = vmatprep.subr.mxu0 0.0
        %730 = vmatpush1.msra.mxu0 0.0
        %731 = vmatprep.mubr.f32.mxu0 0.0
        %732 = vmatmul.mubr.f32.gmra.mrb[0].mxu0 %v647
        %v733 = vpop.f32.mrb[0].mxu0
        %v734 = vadd.f32 0.0, %v733
        %v735 = vpop.f32.mrb[0].mxu0
        %736 = vmatprep.mubr.f32.mxu0 0.0
        %737 = vmatmul.mubr.f32.gmra.mrb[0].mxu0 %v648
        %v738 = vpop.f32.mrb[0].mxu0
        %v739 = vadd.f32 0.0, %v738
        %v740 = vpop.f32.mrb[0].mxu0
        %741 = vmatprep.mubr.f32.mxu0 0.0
        %742 = vmatmul.mubr.f32.gmra.mrb[0].mxu0 %v649
        %v743 = vpop.f32.mrb[0].mxu0
        %v744 = vadd.f32 0.0, %v743
        %v745 = vpop.f32.mrb[0].mxu0
        %746 = vdwg.mxu0
        %v747 = vadd.f32 %v634, %v734
        %v748 = vadd.f32 %v639, %v739
        %v749 = vadd.f32 %v644, %v744
        %v750 = vld [vmem:[%s4] sm:$0x1]
        %v752 = vlaneseq
        %v753 = vshrl.u32 %v752, 7
        %v754 = vsub.s32 0, %v753
        %v755 = vrot.slane %v750, %v754
        %v757 = vadd.f32 %v747, %v755
        %v758 = vadd.f32 %v748, %v755
        %v759 = vadd.f32 %v749, %v755
        %v760 = vmax.f32 %v757, 0.0
        %v761 = vmax.f32 %v758, 0.0
        %v762 = vmax.f32 %v759, 0.0
        %763 = vst [vmem:[#allocation2 + $0x1] sm:$0xff] %v760
        %764 = vst [vmem:[#allocation2 + $0x9] sm:$0xff] %v761
        %765 = vst [vmem:[#allocation2 + $0x11] sm:$0x1f] %v762
        %v766 = vld [vmem:[#allocation2] sm:$0xff]
        %v767 = vld [vmem:[#allocation2 + $0x8] sm:$0xff]
        %v768 = vld [vmem:[#allocation2 + $0x10] sm:$0x1f]
        %v769 = vld [vmem:[#allocation8] sm:$0xff]
        %v770 = vld [vmem:[#allocation8 + $0x8] sm:$0xff]
        %v771 = vld [vmem:[#allocation8 + $0x10] sm:$0xff]
        %v772 = vld [vmem:[#allocation8 + $0x18] sm:$0xff]
        %v773 = vld [vmem:[#allocation8 + $0x20] sm:$0xff]
        %v774 = vld [vmem:[#allocation8 + $0x28] sm:$0xff]
        %v775 = vld [vmem:[#allocation8 + $0x30] sm:$0xff]
        %v776 = vld [vmem:[#allocation8 + $0x38] sm:$0xff]
        %v777 = vld [vmem:[#allocation8 + $0x40] sm:$0xff]
        %v778 = vld [vmem:[#allocation8 + $0x48] sm:$0xff]
        %v779 = vld [vmem:[#allocation8 + $0x50] sm:$0xff]
        %v780 = vld [vmem:[#allocation8 + $0x58] sm:$0xff]
        %v781 = vld [vmem:[#allocation8 + $0x60] sm:$0xff]
        %v782 = vld [vmem:[#allocation8 + $0x68] sm:$0xff]
        %v783 = vld [vmem:[#allocation8 + $0x70] sm:$0xff]
        %v784 = vld [vmem:[#allocation8 + $0x78] sm:$0xff]
        %v785 = vld [vmem:[#allocation2 + $0x1] sm:$0xff]
        %v786 = vld [vmem:[#allocation2 + $0x9] sm:$0xff]
        %v787 = vld [vmem:[#allocation2 + $0x11] sm:$0x1f]
        %s788 = scalar_lea.vmem [#allocation8], 128
        %v789 = vld [vmem:[%s788] sm:$0xff]
        %v790 = vld [vmem:[%s788 + $0x8] sm:$0xff]
        %v791 = vld [vmem:[%s788 + $0x10] sm:$0xff]
        %v792 = vld [vmem:[%s788 + $0x18] sm:$0xff]
        %v793 = vld [vmem:[%s788 + $0x20] sm:$0xff]
        %v794 = vld [vmem:[%s788 + $0x28] sm:$0xff]
        %v795 = vld [vmem:[%s788 + $0x30] sm:$0xff]
        %v796 = vld [vmem:[%s788 + $0x38] sm:$0xff]
        %v797 = vld [vmem:[%s788 + $0x40] sm:$0xff]
        %v798 = vld [vmem:[%s788 + $0x48] sm:$0xff]
        %v799 = vld [vmem:[%s788 + $0x50] sm:$0xff]
        %v800 = vld [vmem:[%s788 + $0x58] sm:$0xff]
        %v801 = vld [vmem:[%s788 + $0x60] sm:$0xff]
        %v802 = vld [vmem:[%s788 + $0x68] sm:$0xff]
        %v803 = vld [vmem:[%s788 + $0x70] sm:$0xff]
        %v804 = vld [vmem:[%s788 + $0x78] sm:$0xff]
        %805 = vmatprep.subr.mxu0 0.0
        %806 = vmatpush1.msra.mxu0 %v789
        %807 = vmatprep.subr.mxu0 0.0
        %808 = vmatpush1.msra.mxu0 %v790
        %809 = vmatprep.subr.mxu0 0.0
        %810 = vmatpush1.msra.mxu0 %v791
        %811 = vmatprep.subr.mxu0 0.0
        %812 = vmatpush1.msra.mxu0 %v792
        %813 = vmatprep.subr.mxu0 0.0
        %814 = vmatpush1.msra.mxu0 %v793
        %815 = vmatprep.subr.mxu0 0.0
        %816 = vmatpush1.msra.mxu0 %v794
        %817 = vmatprep.subr.mxu0 0.0
        %818 = vmatpush1.msra.mxu0 %v795
        %819 = vmatprep.subr.mxu0 0.0
        %820 = vmatpush1.msra.mxu0 %v796
        %821 = vmatprep.subr.mxu0 0.0
        %822 = vmatpush1.msra.mxu0 %v797
        %823 = vmatprep.subr.mxu0 0.0
        %824 = vmatpush1.msra.mxu0 %v798
        %825 = vmatprep.subr.mxu0 0.0
        %826 = vmatpush1.msra.mxu0 %v799
        %827 = vmatprep.subr.mxu0 0.0
        %828 = vmatpush1.msra.mxu0 %v800
        %829 = vmatprep.subr.mxu0 0.0
        %830 = vmatpush1.msra.mxu0 %v801
        %831 = vmatprep.subr.mxu0 0.0
        %832 = vmatpush1.msra.mxu0 %v802
        %833 = vmatprep.subr.mxu0 0.0
        %834 = vmatpush1.msra.mxu0 %v803
        %835 = vmatprep.subr.mxu0 0.0
        %836 = vmatpush1.msra.mxu0 %v804
        %837 = vmatprep.subr.mxu0 0.0
        %838 = vmatpush1.msra.mxu0 0.0
        %839 = vmatprep.subr.mxu0 0.0
        %840 = vmatpush1.msra.mxu0 0.0
        %841 = vmatprep.subr.mxu0 0.0
        %842 = vmatpush1.msra.mxu0 0.0
        %843 = vmatprep.subr.mxu0 0.0
        %844 = vmatpush1.msra.mxu0 0.0
        %845 = vmatprep.subr.mxu0 0.0
        %846 = vmatpush1.msra.mxu0 0.0
        %847 = vmatprep.subr.mxu0 0.0
        %848 = vmatpush1.msra.mxu0 0.0
        %849 = vmatprep.subr.mxu0 0.0
        %850 = vmatpush1.msra.mxu0 0.0
        %851 = vmatprep.subr.mxu0 0.0
        %852 = vmatpush1.msra.mxu0 0.0
        %853 = vmatprep.subr.mxu0 0.0
        %854 = vmatpush1.msra.mxu0 0.0
        %855 = vmatprep.subr.mxu0 0.0
        %856 = vmatpush1.msra.mxu0 0.0
        %857 = vmatprep.subr.mxu0 0.0
        %858 = vmatpush1.msra.mxu0 0.0
        %859 = vmatprep.subr.mxu0 0.0
        %860 = vmatpush1.msra.mxu0 0.0
        %861 = vmatprep.subr.mxu0 0.0
        %862 = vmatpush1.msra.mxu0 0.0
        %863 = vmatprep.subr.mxu0 0.0
        %864 = vmatpush1.msra.mxu0 0.0
        %865 = vmatprep.subr.mxu0 0.0
        %866 = vmatpush1.msra.mxu0 0.0
        %867 = vmatprep.subr.mxu0 0.0
        %868 = vmatpush1.msra.mxu0 0.0
        %869 = vmatprep.mubr.f32.mxu0 0.0
        %870 = vmatmul.mubr.f32.gmra.mrb[0].mxu0 %v785
        %v871 = vpop.f32.mrb[0].mxu0
        %v872 = vadd.f32 0.0, %v871
        %v873 = vpop.f32.mrb[0].mxu0
        %874 = vmatprep.mubr.f32.mxu0 0.0
        %875 = vmatmul.mubr.f32.gmra.mrb[0].mxu0 %v786
        %v876 = vpop.f32.mrb[0].mxu0
        %v877 = vadd.f32 0.0, %v876
        %v878 = vpop.f32.mrb[0].mxu0
        %879 = vmatprep.mubr.f32.mxu0 0.0
        %880 = vmatmul.mubr.f32.gmra.mrb[0].mxu0 %v787
        %v881 = vpop.f32.mrb[0].mxu0
        %v882 = vadd.f32 0.0, %v881
        %v883 = vpop.f32.mrb[0].mxu0
        %884 = vdwg.mxu0
        %885 = vmatprep.subr.mxu0 0.0
        %886 = vmatpush1.msra.mxu0 %v769
        %887 = vmatprep.subr.mxu0 0.0
        %888 = vmatpush1.msra.mxu0 %v770
        %889 = vmatprep.subr.mxu0 0.0
        %890 = vmatpush1.msra.mxu0 %v771
        %891 = vmatprep.subr.mxu0 0.0
        %892 = vmatpush1.msra.mxu0 %v772
        %893 = vmatprep.subr.mxu0 0.0
        %894 = vmatpush1.msra.mxu0 %v773
        %895 = vmatprep.subr.mxu0 0.0
        %896 = vmatpush1.msra.mxu0 %v774
        %897 = vmatprep.subr.mxu0 0.0
        %898 = vmatpush1.msra.mxu0 %v775
        %899 = vmatprep.subr.mxu0 0.0
        %900 = vmatpush1.msra.mxu0 %v776
        %901 = vmatprep.subr.mxu0 0.0
        %902 = vmatpush1.msra.mxu0 %v777
        %903 = vmatprep.subr.mxu0 0.0
        %904 = vmatpush1.msra.mxu0 %v778
        %905 = vmatprep.subr.mxu0 0.0
        %906 = vmatpush1.msra.mxu0 %v779
        %907 = vmatprep.subr.mxu0 0.0
        %908 = vmatpush1.msra.mxu0 %v780
        %909 = vmatprep.subr.mxu0 0.0
        %910 = vmatpush1.msra.mxu0 %v781
        %911 = vmatprep.subr.mxu0 0.0
        %912 = vmatpush1.msra.mxu0 %v782
        %913 = vmatprep.subr.mxu0 0.0
        %914 = vmatpush1.msra.mxu0 %v783
        %915 = vmatprep.subr.mxu0 0.0
        %916 = vmatpush1.msra.mxu0 %v784
        %917 = vmatprep.subr.mxu0 0.0
        %918 = vmatpush1.msra.mxu0 0.0
        %919 = vmatprep.subr.mxu0 0.0
        %920 = vmatpush1.msra.mxu0 0.0
        %921 = vmatprep.subr.mxu0 0.0
        %922 = vmatpush1.msra.mxu0 0.0
        %923 = vmatprep.subr.mxu0 0.0
        %924 = vmatpush1.msra.mxu0 0.0
        %925 = vmatprep.subr.mxu0 0.0
        %926 = vmatpush1.msra.mxu0 0.0
        %927 = vmatprep.subr.mxu0 0.0
        %928 = vmatpush1.msra.mxu0 0.0
        %929 = vmatprep.subr.mxu0 0.0
        %930 = vmatpush1.msra.mxu0 0.0
        %931 = vmatprep.subr.mxu0 0.0
        %932 = vmatpush1.msra.mxu0 0.0
        %933 = vmatprep.subr.mxu0 0.0
        %934 = vmatpush1.msra.mxu0 0.0
        %935 = vmatprep.subr.mxu0 0.0
        %936 = vmatpush1.msra.mxu0 0.0
        %937 = vmatprep.subr.mxu0 0.0
        %938 = vmatpush1.msra.mxu0 0.0
        %939 = vmatprep.subr.mxu0 0.0
        %940 = vmatpush1.msra.mxu0 0.0
        %941 = vmatprep.subr.mxu0 0.0
        %942 = vmatpush1.msra.mxu0 0.0
        %943 = vmatprep.subr.mxu0 0.0
        %944 = vmatpush1.msra.mxu0 0.0
        %945 = vmatprep.subr.mxu0 0.0
        %946 = vmatpush1.msra.mxu0 0.0
        %947 = vmatprep.subr.mxu0 0.0
        %948 = vmatpush1.msra.mxu0 0.0
        %949 = vmatprep.mubr.f32.mxu0 0.0
        %950 = vmatmul.mubr.f32.gmra.mrb[0].mxu0 %v766
        %v951 = vpop.f32.mrb[0].mxu0
        %v952 = vadd.f32 %v872, %v951
        %v953 = vpop.f32.mrb[0].mxu0
        %954 = vmatprep.mubr.f32.mxu0 0.0
        %955 = vmatmul.mubr.f32.gmra.mrb[0].mxu0 %v767
        %v956 = vpop.f32.mrb[0].mxu0
        %v957 = vadd.f32 %v877, %v956
        %v958 = vpop.f32.mrb[0].mxu0
        %959 = vmatprep.mubr.f32.mxu0 0.0
        %960 = vmatmul.mubr.f32.gmra.mrb[0].mxu0 %v768
        %v961 = vpop.f32.mrb[0].mxu0
        %v962 = vadd.f32 %v882, %v961
        %v963 = vpop.f32.mrb[0].mxu0
        %964 = vdwg.mxu0
        %v965 = vld [vmem:[#allocation2 + $0x2] sm:$0xff]
        %v966 = vld [vmem:[#allocation2 + $0xa] sm:$0xff]
        %v967 = vld [vmem:[#allocation2 + $0x12] sm:$0x1f]
        %s968 = scalar_lea.vmem [#allocation8], 256
        %v969 = vld [vmem:[%s968] sm:$0xff]
        %v970 = vld [vmem:[%s968 + $0x8] sm:$0xff]
        %v971 = vld [vmem:[%s968 + $0x10] sm:$0xff]
        %v972 = vld [vmem:[%s968 + $0x18] sm:$0xff]
        %v973 = vld [vmem:[%s968 + $0x20] sm:$0xff]
        %v974 = vld [vmem:[%s968 + $0x28] sm:$0xff]
        %v975 = vld [vmem:[%s968 + $0x30] sm:$0xff]
        %v976 = vld [vmem:[%s968 + $0x38] sm:$0xff]
        %v977 = vld [vmem:[%s968 + $0x40] sm:$0xff]
        %v978 = vld [vmem:[%s968 + $0x48] sm:$0xff]
        %v979 = vld [vmem:[%s968 + $0x50] sm:$0xff]
        %v980 = vld [vmem:[%s968 + $0x58] sm:$0xff]
        %v981 = vld [vmem:[%s968 + $0x60] sm:$0xff]
        %v982 = vld [vmem:[%s968 + $0x68] sm:$0xff]
        %v983 = vld [vmem:[%s968 + $0x70] sm:$0xff]
        %v984 = vld [vmem:[%s968 + $0x78] sm:$0xff]
        %985 = vmatprep.subr.mxu0 0.0
        %986 = vmatpush1.msra.mxu0 %v969
        %987 = vmatprep.subr.mxu0 0.0
        %988 = vmatpush1.msra.mxu0 %v970
        %989 = vmatprep.subr.mxu0 0.0
        %990 = vmatpush1.msra.mxu0 %v971
        %991 = vmatprep.subr.mxu0 0.0
        %992 = vmatpush1.msra.mxu0 %v972
        %993 = vmatprep.subr.mxu0 0.0
        %994 = vmatpush1.msra.mxu0 %v973
        %995 = vmatprep.subr.mxu0 0.0
        %996 = vmatpush1.msra.mxu0 %v974
        %997 = vmatprep.subr.mxu0 0.0
        %998 = vmatpush1.msra.mxu0 %v975
        %999 = vmatprep.subr.mxu0 0.0
        %1000 = vmatpush1.msra.mxu0 %v976
        %1001 = vmatprep.subr.mxu0 0.0
        %1002 = vmatpush1.msra.mxu0 %v977
        %1003 = vmatprep.subr.mxu0 0.0
        %1004 = vmatpush1.msra.mxu0 %v978
        %1005 = vmatprep.subr.mxu0 0.0
        %1006 = vmatpush1.msra.mxu0 %v979
        %1007 = vmatprep.subr.mxu0 0.0
        %1008 = vmatpush1.msra.mxu0 %v980
        %1009 = vmatprep.subr.mxu0 0.0
        %1010 = vmatpush1.msra.mxu0 %v981
        %1011 = vmatprep.subr.mxu0 0.0
        %1012 = vmatpush1.msra.mxu0 %v982
        %1013 = vmatprep.subr.mxu0 0.0
        %1014 = vmatpush1.msra.mxu0 %v983
        %1015 = vmatprep.subr.mxu0 0.0
        %1016 = vmatpush1.msra.mxu0 %v984
        %1017 = vmatprep.subr.mxu0 0.0
        %1018 = vmatpush1.msra.mxu0 0.0
        %1019 = vmatprep.subr.mxu0 0.0
        %1020 = vmatpush1.msra.mxu0 0.0
        %1021 = vmatprep.subr.mxu0 0.0
        %1022 = vmatpush1.msra.mxu0 0.0
        %1023 = vmatprep.subr.mxu0 0.0
        %1024 = vmatpush1.msra.mxu0 0.0
        %1025 = vmatprep.subr.mxu0 0.0
        %1026 = vmatpush1.msra.mxu0 0.0
        %1027 = vmatprep.subr.mxu0 0.0
        %1028 = vmatpush1.msra.mxu0 0.0
        %1029 = vmatprep.subr.mxu0 0.0
        %1030 = vmatpush1.msra.mxu0 0.0
        %1031 = vmatprep.subr.mxu0 0.0
        %1032 = vmatpush1.msra.mxu0 0.0
        %1033 = vmatprep.subr.mxu0 0.0
        %1034 = vmatpush1.msra.mxu0 0.0
        %1035 = vmatprep.subr.mxu0 0.0
        %1036 = vmatpush1.msra.mxu0 0.0
        %1037 = vmatprep.subr.mxu0 0.0
        %1038 = vmatpush1.msra.mxu0 0.0
        %1039 = vmatprep.subr.mxu0 0.0
        %1040 = vmatpush1.msra.mxu0 0.0
        %1041 = vmatprep.subr.mxu0 0.0
        %1042 = vmatpush1.msra.mxu0 0.0
        %1043 = vmatprep.subr.mxu0 0.0
        %1044 = vmatpush1.msra.mxu0 0.0
        %1045 = vmatprep.subr.mxu0 0.0
        %1046 = vmatpush1.msra.mxu0 0.0
        %1047 = vmatprep.subr.mxu0 0.0
        %1048 = vmatpush1.msra.mxu0 0.0
        %1049 = vmatprep.mubr.f32.mxu0 0.0
        %1050 = vmatmul.mubr.f32.gmra.mrb[0].mxu0 %v965
        %v1051 = vpop.f32.mrb[0].mxu0
        %v1052 = vadd.f32 0.0, %v1051
        %v1053 = vpop.f32.mrb[0].mxu0
        %1054 = vmatprep.mubr.f32.mxu0 0.0
        %1055 = vmatmul.mubr.f32.gmra.mrb[0].mxu0 %v966
        %v1056 = vpop.f32.mrb[0].mxu0
        %v1057 = vadd.f32 0.0, %v1056
        %v1058 = vpop.f32.mrb[0].mxu0
        %1059 = vmatprep.mubr.f32.mxu0 0.0
        %1060 = vmatmul.mubr.f32.gmra.mrb[0].mxu0 %v967
        %v1061 = vpop.f32.mrb[0].mxu0
        %v1062 = vadd.f32 0.0, %v1061
        %v1063 = vpop.f32.mrb[0].mxu0
        %1064 = vdwg.mxu0
        %v1065 = vadd.f32 %v952, %v1052
        %v1066 = vadd.f32 %v957, %v1057
        %v1067 = vadd.f32 %v962, %v1062
        %v1068 = vld [vmem:[%s6] sm:$0x1]
        %v1070 = vlaneseq
        %v1071 = vshrl.u32 %v1070, 7
        %v1072 = vsub.s32 0, %v1071
        %v1073 = vrot.slane %v1068, %v1072
        %v1075 = vadd.f32 %v1065, %v1073
        %v1076 = vadd.f32 %v1066, %v1073
        %v1077 = vadd.f32 %v1067, %v1073
        %v1078 = vmax.f32 %v1075, 0.0
        %v1079 = vmax.f32 %v1076, 0.0
        %v1080 = vmax.f32 %v1077, 0.0
        %1081 = vst [vmem:[%s342] sm:$0xff] %v1078
        %1082 = vst [vmem:[%s342 + $0x8] sm:$0xff] %v1079
        %1083 = vst [vmem:[%s342 + $0x10] sm:$0x1f] %v1080
        %p1084 = scmp.lt.s32.totalorder %s23, 1
        %s1085 = scalar_select %p1084, %s23, 1
        %s1086 = smul.addr %s1085, 3
        %s1087 = smul.addr %s1086, 8
        %s1088 = scalar_lea.vmem %s7, %s1087
        // Predicated region
        $region65: #{tpu_custom_call.1} parent=47 // pred_check
          %p1089 = pneg %p193
        $region66: #{tpu_custom_call.1} parent=47 // pred_check_branch
          %1091 = sbr.rel (%p1089) target = $region68
        $region67: #{tpu_custom_call.1} parent=47 // pred_region
          _
        $region68: #{tpu_custom_call.1} parent=47 // pred_fallthru
          _
      $region48: #{tpu_custom_call.1} parent=5 // pred_fallthru
        _
      %p1092 = scmp.le.s32.totalorder 2, %s18
      // Predicated region
      $region69: #{tpu_custom_call.1} parent=5 // pred_check
        %p1093 = pneg %p1092
      $region70: #{tpu_custom_call.1} parent=5 // pred_check_branch
        %1095 = sbr.rel (%p1093) target = $region72
      $region71: #{tpu_custom_call.1} parent=5 // pred_region
        %s1096 = ssub.s32 %s18, 2
        // Predicated region
        $region73: #{tpu_custom_call.1} parent=71 // pred_check
          %p1097 = pneg %p199
        $region74: #{tpu_custom_call.1} parent=71 // pred_check_branch
          %1099 = sbr.rel (%p1097) target = $region76
        $region75: #{tpu_custom_call.1} parent=71 // pred_region
          %p1100 = scmp.lt.s32.totalorder %s24, 1
          %s1101 = scalar_select %p1100, %s24, 1
          %s1102 = smul.addr %s1101, 3
          %s1103 = smul.addr %s1102, 8
          %s1104 = scalar_lea.vmem %s7, %s1103
        $region76: #{tpu_custom_call.1} parent=71 // pred_fallthru
          _
      $region72: #{tpu_custom_call.1} parent=5 // pred_fallthru
        _
    $region6: #{tpu_custom_call.1} parent=1 // loop_footer
      %s22 = sadd.s32 1, %s18
    $region7: #{tpu_custom_call.1} parent=1 // loop_footer_branch
      %17 = sbr.rel target = $region3
    $region8: #{tpu_custom_call.1} parent=1 // loop_exit
      _
    %1105 = vsyncpa [#allocation4], 1
    %s1106 = scalar_lea.sflag [#allocation4], 1
    %1107 = vsyncpa %s1106, 1
    %1108 = vsyncpa [#allocation6], 1
    %1109 = vsyncpa [#allocation9], 1

</llo_original>
